<compile_context>
chip_gen: v7x
topology: tpu7x:2x2x1
jax: 0.10.0
libtpu: 0.0.40
codegen_flags: <defaults>
</compile_context>

<pallas_src>
import jax
import jax.numpy as jnp
from jax import lax
from jax.experimental import pallas as pl
from jax.experimental.pallas import tpu as pltpu


def _row_multiple(dtype):
    """Sublane multiple required for the second-to-last block dim."""
    size = dtype.itemsize
    if size >= 4:
        return 8
    if size == 2:
        return 16
    return 32


def _per_step_byte_target():
    """Per-grid-step HBM byte budget chosen per TPU generation."""
    kind = ""
    try:
        kind = jax.devices()[0].device_kind.lower()
    except Exception:
        pass
    if "v5" in kind:
        return int(2.5 * 2**20)   # ~0.82 TB/s -> ~3 us of DMA per step
    if "v6" in kind:
        return int(4.5 * 2**20)   # ~1.4 TB/s
    if "v7" in kind:
        return int(8.0 * 2**20)   # ~3.2 TB/s/TC, but only 64 MiB VMEM
    return int(4.0 * 2**20)


def _make_focal_kernel(*, class_num, alpha_consts, gamma, hw,
                       rows_per_block, needs_mask):
    """Kernel body.

    Ref layout (positions are sublane x lane dense):
      x_ref  : (C, R, 128)  class probabilities for R*128 positions
      t_ref  : (R, 128)     integer target class ids
      out_ref: (1,1,1,1)    partial loss sum for this (batch, tile) block
    """

    def kernel(x_ref, t_ref, out_ref):
        t = t_ref[...]                                        # (R, 128) int
        r, l = t.shape

        # Class gather as an unrolled compare/select chain: no one-hot
        # multiply+sum, no int->float convert, no cross-sublane XLU reduce.
        p = x_ref[class_num - 1].astype(jnp.float32)
        for c in range(class_num - 2, -1, -1):
            p = jnp.where(t == c, x_ref[c].astype(jnp.float32), p)
        p = p + 1e-10

        if needs_mask:
            # Tail positions (pad to 128 lanes and the partial final row
            # block) are forced to p == 1 BEFORE log/pow, which makes their
            # loss contribution exactly 0 -- no second mask needed.
            j = pl.program_id(1)
            row = lax.broadcasted_iota(jnp.int32, (r, l), 0)
            lane = lax.broadcasted_iota(jnp.int32, (r, l), 1)
            pos = (j * rows_per_block + row) * 128 + lane
            p = jnp.where(pos < hw, p, 1.0)

        log_p = jnp.log(p)
        if gamma > 0:
            one_m_p = 1.0 - p
            if float(gamma).is_integer():
                # integer gamma -> plain VPU multiplies (no exp/log lowering)
                pw = one_m_p
                for _ in range(int(gamma) - 1):
                    pw = pw * one_m_p
            else:
                # TODO(synk): fractional gamma clamps (1-p) at 0 to avoid NaN
                # from the exp(gamma*log(.)) lowering; torch would NaN here.
                pw = jnp.power(jnp.maximum(one_m_p, 0.0), gamma)
            contrib = pw * log_p
        else:
            contrib = log_p

        if alpha_consts is not None:
            # alpha[t] as a select chain over trace-time constants
            # (no alpha stream, no second (C, T)-sized masked reduce).
            a = jnp.float32(alpha_consts[class_num - 1])
            for c in range(class_num - 2, -1, -1):
                a = jnp.where(t == c, alpha_consts[c], a)
            contrib = a * contrib

        out_ref[...] = (-jnp.sum(contrib)).reshape(1, 1, 1, 1)

    return kernel


def focal_loss(x, target, *, class_num, alpha=None, gamma=2,
               size_average=True, rows_per_tile=None):
    """Pallas implementation of FocalLoss.forward for (N, C, spatial...) input.

    x      : (N, C, spatial...) float class probabilities
    target : (N, spatial...)    integer class ids
    """
    # TODO(synk): the 2-D (M, C) input path of the module is not implemented
    # (it would need a host-side transpose to a channels-leading layout).
    assert x.ndim >= 3, "expects (N, C, spatial...) input"
    n, c = int(x.shape[0]), int(x.shape[1])
    assert c == class_num
    hw = 1
    for d in x.shape[2:]:
        hw *= int(d)

    # Keep narrow native dtypes in HBM (cast after the tile is in VMEM).
    x3 = x.reshape(n, c, hw)
    if x3.dtype not in (jnp.float32, jnp.bfloat16):
        x3 = x3.astype(jnp.float32)
    t2 = target.reshape(n, hw)
    if t2.dtype not in (jnp.int8, jnp.int16, jnp.int32):
        t2 = t2.astype(jnp.int32)

    # Positions are laid out sublane x lane dense: (N, C, Rtot, 128).
    hw_pad = 128 * pl.cdiv(hw, 128)
    if hw_pad != hw:
        # TODO(synk): this pad is one extra HBM copy; only hit when the
        # spatial extent is not a multiple of 128.
        x3 = jnp.pad(x3, ((0, 0), (0, 0), (0, hw_pad - hw)))
        t2 = jnp.pad(t2, ((0, 0), (0, hw_pad - hw)))
    rtot = hw_pad // 128
    x4 = x3.reshape(n, c, rtot, 128)
    t3 = t2.reshape(n, rtot, 128)

    x_item = x4.dtype.itemsize
    t_item = t3.dtype.itemsize
    bytes_per_row = 128 * (c * x_item + t_item)
    mult = max(_row_multiple(x4.dtype), _row_multiple(t3.dtype))

    if rows_per_tile is None:
        rows_target = _per_step_byte_target() // bytes_per_row
    else:
        rows_target = int(rows_per_tile)
    # Cap so the double-buffered tile stays inside scoped VMEM on every
    # generation (v7x has only 64 MiB physical / 32 MiB default scoped).
    rows_cap = max(mult, ((12 * 2**20) // bytes_per_row) // mult * mult)
    rows_target = max(1, min(rows_target, rows_cap))

    if rtot <= rows_target:
        rows = rtot                       # full extent: always a legal block
        nj = 1
    else:
        rows = max(mult, (rows_target // mult) * mult)
        nj = pl.cdiv(rtot, rows)
    needs_mask = (nj * rows * 128 != hw)

    if alpha is not None:
        alpha_list = [float(a) for a in alpha]
        assert len(alpha_list) == class_num
        s = sum(alpha_list)
        alpha_consts = [a / s for a in alpha_list]
    else:
        alpha_consts = None               # uniform 1/C folded into final scale

    kernel = _make_focal_kernel(
        class_num=class_num, alpha_consts=alpha_consts, gamma=gamma, hw=hw,
        rows_per_block=rows, needs_mask=needs_mask)

    # TODO(synk): when HW is tiny and N is large, batch-blocking (several
    # batch elements per grid step) would further amortize per-step overhead.
    partials = pl.pallas_call(
        kernel,
        out_shape=jax.ShapeDtypeStruct((n, nj, 1, 1), jnp.float32),
        grid_spec=pltpu.PrefetchScalarGridSpec(
            num_scalar_prefetch=0,
            grid=(n, nj),
            in_specs=[
                pl.BlockSpec((pl.Squeezed(), c, rows, 128),
                             lambda b, j: (b, 0, j, 0)),
                pl.BlockSpec((pl.Squeezed(), rows, 128),
                             lambda b, j: (b, j, 0)),
            ],
            out_specs=pl.BlockSpec((1, 1, 1, 1), lambda b, j: (b, j, 0, 0)),
        ),
        compiler_params=pltpu.CompilerParams(
            dimension_semantics=("parallel", "parallel"),
            vmem_limit_bytes=32 * 2**20),
    )(x4, t3)

    total = jnp.sum(partials)
    if alpha is None:
        total = total / jnp.float32(class_num)   # uniform alpha = 1/C
    if size_average:
        total = total / jnp.float32(n * hw)
    return total


def _reference_focal_loss(x, target, *, class_num, alpha=None, gamma=2,
                          size_average=True):
    # Pure-JAX reference mirroring the PyTorch module exactly.
    xm = jnp.moveaxis(x, 1, -1).reshape(-1, class_num).astype(jnp.float32)
    t = target.reshape(-1).astype(jnp.int32)
    if alpha is None:
        alpha_vec = jnp.ones((class_num,), jnp.float32) / class_num
    else:
        alpha_vec = jnp.asarray(alpha, jnp.float32)
        alpha_vec = alpha_vec / jnp.sum(alpha_vec)
    mask = jax.nn.one_hot(t, class_num, dtype=jnp.float32)
    a = alpha_vec[t][:, None]
    probs = jnp.sum(xm * mask, axis=1, keepdims=True) + 1e-10
    log_probs = jnp.log(probs)
    if gamma > 0:
        batch_loss = -a * jnp.power(1.0 - probs, gamma) * log_probs
    else:
        batch_loss = -a * log_probs
    return jnp.mean(batch_loss) if size_average else jnp.sum(batch_loss)


if __name__ == "__main__":
    class_num = 4
    n, h, w = 2, 16, 16

    key = jax.random.PRNGKey(0)
    k1, k2, k3, k4 = jax.random.split(key, 4)
    logits = jax.random.normal(k1, (n, class_num, h, w), jnp.float32)
    x = jax.nn.softmax(logits, axis=1)            # module expects probabilities
    target = jax.random.randint(k2, (n, h, w), 0, class_num, jnp.int32)

    # 1) default (uniform alpha) path
    loss = jax.block_until_ready(
        focal_loss(x, target, class_num=class_num, gamma=2, size_average=True))
    ref = _reference_focal_loss(x, target, class_num=class_num, gamma=2)
    assert jnp.allclose(loss, ref, rtol=1e-5, atol=1e-6), (loss, ref)

    # 2) non-uniform alpha path (alpha folded into in-kernel constants)
    alpha = [0.1, 0.2, 0.3, 0.4]
    loss_a = jax.block_until_ready(
        focal_loss(x, target, class_num=class_num, alpha=alpha, gamma=2))
    ref_a = _reference_focal_loss(x, target, class_num=class_num,
                                  alpha=alpha, gamma=2)
    assert jnp.allclose(loss_a, ref_a, rtol=1e-5, atol=1e-6), (loss_a, ref_a)

    # 3) spatial extent not a multiple of 128 -> exercises the tail mask path
    h2, w2 = 12, 20
    logits2 = jax.random.normal(k3, (1, class_num, h2, w2), jnp.float32)
    x2 = jax.nn.softmax(logits2, axis=1)
    t2 = jax.random.randint(k2, (1, h2, w2), 0, class_num, jnp.int32)
    loss2 = jax.block_until_ready(
        focal_loss(x2, t2, class_num=class_num, gamma=2))
    ref2 = _reference_focal_loss(x2, t2, class_num=class_num, gamma=2)
    assert jnp.allclose(loss2, ref2, rtol=1e-5, atol=1e-6), (loss2, ref2)

    # 4) multi-tile spatial axis with a partial final row block + sum mode
    h3, w3 = 40, 48                               # HW = 1920 = 15 * 128
    logits3 = jax.random.normal(k4, (2, class_num, h3, w3), jnp.float32)
    x3 = jax.nn.softmax(logits3, axis=1)
    t3 = jax.random.randint(k3, (2, h3, w3), 0, class_num, jnp.int32)
    loss3 = jax.block_until_ready(
        focal_loss(x3, t3, class_num=class_num, gamma=2, size_average=False,
                   rows_per_tile=8))
    ref3 = _reference_focal_loss(x3, t3, class_num=class_num, gamma=2,
                                 size_average=False)
    assert jnp.allclose(loss3, ref3, rtol=1e-5, atol=1e-5), (loss3, ref3)

    # 5) gamma = 0 path
    loss0 = jax.block_until_ready(
        focal_loss(x, target, class_num=class_num, gamma=0))
    ref0 = _reference_focal_loss(x, target, class_num=class_num, gamma=0)
    assert jnp.allclose(loss0, ref0, rtol=1e-5, atol=1e-6), (loss0, ref0)

    print("KERNEL_OK")
</pallas_src>

<mosaic_0001>
module attributes {stable_mosaic.version = 11 : i64} {
  func.func @kernel(%arg0: i32, %arg1: i32, %arg2: memref<1x4x2x128xf32, #tpu.memory_space<vmem>>, %arg3: memref<1x2x128xi32, #tpu.memory_space<vmem>>, %arg4: memref<1x1x1x1xf32, #tpu.memory_space<vmem>>) attributes {dimension_semantics = [#tpu.dimension_semantics<parallel>, #tpu.dimension_semantics<parallel>], iteration_bounds = array<i64: 2, 1>, scalar_prefetch = 0 : i64, scratch_operands = 0 : i64, tpu.core_type = #tpu.core_type<tc>, window_params = [{transform_indices = @transform_0, window_bounds = array<i64: 1, 4, 2, 128>}, {transform_indices = @transform_1, window_bounds = array<i64: 1, 2, 128>}, {transform_indices = @transform_2, window_bounds = array<i64: 1, 1, 1, 1>}]} {
    %c0 = arith.constant 0 : index
    %c0_0 = arith.constant 0 : index
    %c0_1 = arith.constant 0 : index
    %0 = vector.load %arg3[%c0, %c0_0, %c0_1] : memref<1x2x128xi32, #tpu.memory_space<vmem>>, vector<1x2x128xi32>
    %1 = vector.shape_cast %0 : vector<1x2x128xi32> to vector<2x128xi32>
    %c0_2 = arith.constant 0 : index
    %c3 = arith.constant 3 : index
    %c0_3 = arith.constant 0 : index
    %c0_4 = arith.constant 0 : index
    %2 = vector.load %arg2[%c0_2, %c3, %c0_3, %c0_4] : memref<1x4x2x128xf32, #tpu.memory_space<vmem>>, vector<1x1x2x128xf32>
    %3 = vector.shape_cast %2 : vector<1x1x2x128xf32> to vector<2x128xf32>
    %c2_i32 = arith.constant 2 : i32
    %4 = vector.broadcast %c2_i32 : i32 to vector<2x128xi32>
    %5 = arith.cmpi eq, %1, %4 : vector<2x128xi32>
    %c0_5 = arith.constant 0 : index
    %c2 = arith.constant 2 : index
    %c0_6 = arith.constant 0 : index
    %c0_7 = arith.constant 0 : index
    %6 = vector.load %arg2[%c0_5, %c2, %c0_6, %c0_7] : memref<1x4x2x128xf32, #tpu.memory_space<vmem>>, vector<1x1x2x128xf32>
    %7 = vector.shape_cast %6 : vector<1x1x2x128xf32> to vector<2x128xf32>
    %8 = arith.select %5, %7, %3 : vector<2x128xi1>, vector<2x128xf32>
    %c1_i32 = arith.constant 1 : i32
    %9 = vector.broadcast %c1_i32 : i32 to vector<2x128xi32>
    %10 = arith.cmpi eq, %1, %9 : vector<2x128xi32>
    %c0_8 = arith.constant 0 : index
    %c1 = arith.constant 1 : index
    %c0_9 = arith.constant 0 : index
    %c0_10 = arith.constant 0 : index
    %11 = vector.load %arg2[%c0_8, %c1, %c0_9, %c0_10] : memref<1x4x2x128xf32, #tpu.memory_space<vmem>>, vector<1x1x2x128xf32>
    %12 = vector.shape_cast %11 : vector<1x1x2x128xf32> to vector<2x128xf32>
    %13 = arith.select %10, %12, %8 : vector<2x128xi1>, vector<2x128xf32>
    %c0_i32 = arith.constant 0 : i32
    %14 = vector.broadcast %c0_i32 : i32 to vector<2x128xi32>
    %15 = arith.cmpi eq, %1, %14 : vector<2x128xi32>
    %c0_11 = arith.constant 0 : index
    %c0_12 = arith.constant 0 : index
    %c0_13 = arith.constant 0 : index
    %c0_14 = arith.constant 0 : index
    %16 = vector.load %arg2[%c0_11, %c0_12, %c0_13, %c0_14] : memref<1x4x2x128xf32, #tpu.memory_space<vmem>>, vector<1x1x2x128xf32>
    %17 = vector.shape_cast %16 : vector<1x1x2x128xf32> to vector<2x128xf32>
    %18 = arith.select %15, %17, %13 : vector<2x128xi1>, vector<2x128xf32>
    %cst = arith.constant 1.000000e-10 : f32
    %19 = vector.broadcast %cst : f32 to vector<2x128xf32>
    %20 = arith.addf %18, %19 : vector<2x128xf32>
    %21 = math.log %20 : vector<2x128xf32>
    %cst_15 = arith.constant 1.000000e+00 : f32
    %22 = vector.broadcast %cst_15 : f32 to vector<2x128xf32>
    %23 = arith.subf %22, %20 : vector<2x128xf32>
    %24 = arith.mulf %23, %23 : vector<2x128xf32>
    %25 = arith.mulf %24, %21 : vector<2x128xf32>
    %26 = vector.shape_cast %25 : vector<2x128xf32> to vector<1x2x128xf32>
    %cst_16 = arith.constant dense<0.000000e+00> : vector<1xf32>
    %27 = vector.multi_reduction <add>, %26, %cst_16 [1, 2] : vector<1x2x128xf32> to vector<1xf32>
    %28 = vector.shape_cast %27 : vector<1xf32> to vector<1x1x1xf32>
    %29 = vector.extract %28[0, 0, 0] : f32 from vector<1x1x1xf32>
    %cst_17 = arith.constant 0.000000e+00 : f32
    %30 = arith.subf %cst_17, %29 : f32
    %31 = vector.broadcast %30 : f32 to vector<1x1x1x1xf32>
    %c0_18 = arith.constant 0 : index
    %c0_19 = arith.constant 0 : index
    %c0_20 = arith.constant 0 : index
    %c0_21 = arith.constant 0 : index
    %32 = vector.load %arg4[%c0_18, %c0_19, %c0_20, %c0_21] : memref<1x1x1x1xf32, #tpu.memory_space<vmem>>, vector<1x1x1x1xf32>
    tpu.vector_store %arg4[%c0_18, %c0_19, %c0_20, %c0_21], %31 {strides = array<i32>} : memref<1x1x1x1xf32, #tpu.memory_space<vmem>>, vector<1x1x1x1xf32>,
    return
  }
  func.func @transform_0(%arg0: i32, %arg1: i32) -> (i32, i32, i32, i32) {
    %c0_i32 = arith.constant 0 : i32
    %c0_i32_0 = arith.constant 0 : i32
    %c0_i32_1 = arith.constant 0 : i32
    return %arg0, %c0_i32, %arg1, %c0_i32_0 : i32, i32, i32, i32
  }
  func.func @transform_1(%arg0: i32, %arg1: i32) -> (i32, i32, i32) {
    %c0_i32 = arith.constant 0 : i32
    %c0_i32_0 = arith.constant 0 : i32
    return %arg0, %arg1, %c0_i32 : i32, i32, i32
  }
  func.func @transform_2(%arg0: i32, %arg1: i32) -> (i32, i32, i32, i32) {
    %c0_i32 = arith.constant 0 : i32
    %c0_i32_0 = arith.constant 0 : i32
    %c0_i32_1 = arith.constant 0 : i32
    return %arg0, %arg1, %c0_i32, %c0_i32_0 : i32, i32, i32, i32
  }
}

</mosaic_0001>

<llo_original>
// kernel: tpu_custom_call.1
$region0: #{tpu_custom_call.1}
  #allocation0 [shape = 'u32[]', space=smem, size = 0x4, offset = 0x4, fixed_abs, tag = 'smem constant byte address 0x4 - core index']
  #allocation1 [shape = 'u32[144,128]{1,0:T(1,128)}', space=vmem, size = 0x12000, scoped, tag = 'internal scratch']
  %s0 = inlined_call_operand.hbm [shape: f32[2,4,2,128], index: 0, kind: input, shape index: {}]
  %s1 = inlined_call_operand.hbm [shape: s32[2,2,128], index: 1, kind: input, shape index: {}]
  %s2 = inlined_call_operand.vmem [shape: f32[2,1,1,1], index: 2, kind: output, shape index: {}]
  %s3 = sld [smem:[#allocation0]]
  $region49: #{tpu_custom_call.1} parent=0
    _
  %s5 = ssub.s32 1, %s3
  %s6 = scalar_select 0, %s5, %s3
  $region1: #{tpu_custom_call.1} parent=0
    #allocation2 [shape = 'u8[8192]{0}', space=vmem, size = 0x2000, scoped, tag = 'input window, operand 0']
    #allocation3 [shape = 's32[2]{0}', space=sflag, size = 0x8, scoped, tag = 'scoped memory for tpu_custom_call.1']
    #allocation4 [shape = 'u8[2048]{0}', space=vmem, size = 0x800, scoped, tag = 'input window, operand 1']
    #allocation5 [shape = 's32[2]{0}', space=sflag, size = 0x8, scoped, tag = 'scoped memory for tpu_custom_call.1']
    %7 = vsyncpa [#allocation3], 0
    %s8 = scalar_lea.sflag [#allocation3], 1
    %9 = vsyncpa %s8, 0
    %10 = vsyncpa [#allocation5], 0
    %s11 = scalar_lea.sflag [#allocation5], 1
    %12 = vsyncpa %s11, 0
    loop: start=0, step=1, limit=4
    $region2: #{tpu_custom_call.1} parent=1 // loop_pre_header
      _
    $region3: #{tpu_custom_call.1} parent=1 // loop_header
      %s14 = sphi 0, %s18
      %p15 = scmp.ge.s32.totalorder %s14, 4
      %s21 = sphi 0, %s33
      %s22 = sphi 0, %s29
      %s23 = sphi 0, %s21
      %s24 = sphi 0, %s22
      %s25 = sphi 0, %s23
      %s26 = sphi 0, %s24
      %s38 = sphi 0, %s40
      %s41 = sphi 0, %s38
      %s42 = sphi 0, %s41
      %s58 = sphi 0, %s42
      %s66 = sphi 0, %s68
      %s69 = sphi 0, %s66
      %s70 = sphi 0, %s69
      %s86 = sphi 0, %s70
      %s94 = sphi 0, %s96
      %s97 = sphi 0, %s94
      %s98 = sphi 0, %s97
      %s114 = sphi 0, %s98
    $region4: #{tpu_custom_call.1} parent=1 // loop_header_branch
      %17 = sbr.rel (%p15) target = $region8
    $region5: #{tpu_custom_call.1} parent=1 // loop_body
      %s19 = ssub.s32 %s14, 1
      %s20 = ssub.s32 %s14, 2
      %s27 = sadd.s32 1, %s22
      %p28 = scmp.ge.s32.totalorder %s27, 1
      %s29 = scalar_select %p28, 0, %s27
      %s30 = sadd.s32 1, %s21
      %s31 = scalar_select %p28, %s30, %s21
      %p32 = scmp.ge.s32.totalorder %s31, 2
      %s33 = scalar_select %p32, 0, %s31
      %s34 = ssub.s32 %s21, %s33
      %s35 = ssub.s32 %s22, %s29
      %s36 = sor.u32 %s34, %s35
      %p37 = scmp.eq.s32.totalorder %s36, 0
      %s39 = sadd.s32 %s38, 1
      %s40 = scalar_select %p37, %s38, %s39
      %p43 = pneg %p37
      %p44 = scmp.eq.s32.totalorder %s14, 1
      %p45 = por %p43, %p44
      %p46 = scmp.ne.s32.totalorder %s38, %s41
      %p47 = scmp.eq.s32.totalorder %s14, 0
      %p48 = por %p46, %p47
      %p49 = scmp.ne.s32.totalorder %s38, %s41
      %p50 = scmp.eq.s32.totalorder %s19, 1
      %p51 = por %p49, %p50
      %p52 = scmp.ne.s32.totalorder %s41, %s42
      %p53 = scmp.eq.s32.totalorder %s19, 0
      %p54 = por %p52, %p53
      %p55 = scmp.ne.s32.totalorder %s41, %s42
      %p56 = scmp.eq.s32.totalorder %s20, 1
      %p57 = por %p55, %p56
      %p59 = scmp.ne.s32.totalorder %s42, %s58
      %p60 = scmp.eq.s32.totalorder %s20, 0
      %p61 = por %p59, %p60
      %s62 = ssub.s32 %s21, %s33
      %s63 = ssub.s32 %s22, %s29
      %s64 = sor.u32 %s62, %s63
      %p65 = scmp.eq.s32.totalorder %s64, 0
      %s67 = sadd.s32 %s66, 1
      %s68 = scalar_select %p65, %s66, %s67
      %p71 = pneg %p65
      %p72 = scmp.eq.s32.totalorder %s14, 1
      %p73 = por %p71, %p72
      %p74 = scmp.ne.s32.totalorder %s66, %s69
      %p75 = scmp.eq.s32.totalorder %s14, 0
      %p76 = por %p74, %p75
      %p77 = scmp.ne.s32.totalorder %s66, %s69
      %p78 = scmp.eq.s32.totalorder %s19, 1
      %p79 = por %p77, %p78
      %p80 = scmp.ne.s32.totalorder %s69, %s70
      %p81 = scmp.eq.s32.totalorder %s19, 0
      %p82 = por %p80, %p81
      %p83 = scmp.ne.s32.totalorder %s69, %s70
      %p84 = scmp.eq.s32.totalorder %s20, 1
      %p85 = por %p83, %p84
      %p87 = scmp.ne.s32.totalorder %s70, %s86
      %p88 = scmp.eq.s32.totalorder %s20, 0
      %p89 = por %p87, %p88
      %s90 = ssub.s32 %s21, %s33
      %s91 = ssub.s32 %s22, %s29
      %s92 = sor.u32 %s90, %s91
      %p93 = scmp.eq.s32.totalorder %s92, 0
      %s95 = sadd.s32 %s94, 1
      %s96 = scalar_select %p93, %s94, %s95
      %p99 = pneg %p93
      %p100 = scmp.eq.s32.totalorder %s14, 1
      %p101 = por %p99, %p100
      %p102 = scmp.ne.s32.totalorder %s94, %s97
      %p103 = scmp.eq.s32.totalorder %s14, 0
      %p104 = por %p102, %p103
      %p105 = scmp.ne.s32.totalorder %s94, %s97
      %p106 = scmp.eq.s32.totalorder %s19, 1
      %p107 = por %p105, %p106
      %p108 = scmp.ne.s32.totalorder %s97, %s98
      %p109 = scmp.eq.s32.totalorder %s19, 0
      %p110 = por %p108, %p109
      %p111 = scmp.ne.s32.totalorder %s97, %s98
      %p112 = scmp.eq.s32.totalorder %s20, 1
      %p113 = por %p111, %p112
      %p115 = scmp.ne.s32.totalorder %s98, %s114
      %p116 = scmp.eq.s32.totalorder %s20, 0
      %p117 = por %p115, %p116
      %p118 = scmp.le.s32.totalorder 1, %s14
      %p119 = scmp.lt.s32.totalorder %s14, 3
      %p120 = pnand %p118, %p119
      %p121 = pneg %p120
      // Predicated region
      $region9: #{tpu_custom_call.1} parent=5 // pred_check
        _
      $region10: #{tpu_custom_call.1} parent=5 // pred_check_branch
        %123 = sbr.rel (%p120) target = $region12
      $region11: #{tpu_custom_call.1} parent=5 // pred_region
        %s124 = ssub.s32 %s14, 1
      $region12: #{tpu_custom_call.1} parent=5 // pred_fallthru
        _
      %p125 = scmp.lt.s32.totalorder %s14, 2
      // Predicated region
      $region13: #{tpu_custom_call.1} parent=5 // pred_check
        %p126 = pneg %p125
      $region14: #{tpu_custom_call.1} parent=5 // pred_check_branch
        %128 = sbr.rel (%p126) target = $region16
      $region15: #{tpu_custom_call.1} parent=5 // pred_region
        // Predicated region
        $region17: #{tpu_custom_call.1} parent=15 // pred_check
          %p129 = pneg %p48
        $region18: #{tpu_custom_call.1} parent=15 // pred_check_branch
          %131 = sbr.rel (%p129) target = $region20
        $region19: #{tpu_custom_call.1} parent=15 // pred_region
          %s132 = sand.u32 %s38, 1
          %s133 = scalar_lea.sflag [#allocation3], %s132
          %s134 = sand.u32 %s38, 1
          %s135 = smul.addr %s134, 8
          %s136 = scalar_lea.vmem [#allocation2], %s135
          %s138 = ssub.s32 128, 128
          %139 = vsyncadd %s133, %s138
          %s140 = smul.addr %s21, 4
          %s141 = sadd.s32 %s22, %s140
          %s142 = smul.addr %s141, 32
          %s143 = scalar_lea.hbm %s0, %s142
          %s144 = sshll.u32 %s136, 4
          %s145 = int_to_ptr.vmem [resolvable:$true] %s144
          %150 = dma.hbm_to_vmem [thread:$0]  %s143, 128, %s145, %s133, 32, 32, 2
        $region20: #{tpu_custom_call.1} parent=15 // pred_fallthru
          _
        // Predicated region
        $region21: #{tpu_custom_call.1} parent=15 // pred_check
          %p151 = pneg %p76
        $region22: #{tpu_custom_call.1} parent=15 // pred_check_branch
          %153 = sbr.rel (%p151) target = $region24
        $region23: #{tpu_custom_call.1} parent=15 // pred_region
          %s154 = sand.u32 %s66, 1
          %s155 = scalar_lea.sflag [#allocation5], %s154
          %s156 = sand.u32 %s66, 1
          %s157 = smul.addr %s156, 2
          %s158 = scalar_lea.vmem [#allocation4], %s157
          %s160 = ssub.s32 32, 32
          %161 = vsyncadd %s155, %s160
          %s162 = sadd.s32 %s22, %s21
          %s163 = smul.addr %s162, 32
          %s164 = scalar_lea.hbm %s1, %s163
          %s166 = sshll.u32 %s158, 4
          %s167 = int_to_ptr.vmem [resolvable:$true] %s166
          %169 = dma.hbm_to_vmem [thread:$0]  %s164, 32, %s167, %s155
        $region24: #{tpu_custom_call.1} parent=15 // pred_fallthru
          _
      $region16: #{tpu_custom_call.1} parent=5 // pred_fallthru
        _
      %p170 = scmp.le.s32.totalorder 1, %s14
      %p171 = scmp.lt.s32.totalorder %s14, 3
      %p172 = pnand %p170, %p171
      %p173 = pneg %p172
      // Predicated region
      $region25: #{tpu_custom_call.1} parent=5 // pred_check
        _
      $region26: #{tpu_custom_call.1} parent=5 // pred_check_branch
        %175 = sbr.rel (%p172) target = $region28
      $region27: #{tpu_custom_call.1} parent=5 // pred_region
        %s176 = ssub.s32 %s14, 1
        %s177 = sand.u32 %s41, 1
        %s178 = scalar_lea.sflag [#allocation3], %s177
        %s179 = sand.u32 %s41, 1
        %s180 = smul.addr %s179, 8
        %s181 = scalar_lea.vmem [#allocation2], %s180
        // Predicated region
        $region29: #{tpu_custom_call.1} parent=27 // pred_check
          %p182 = pneg %p54
        $region30: #{tpu_custom_call.1} parent=27 // pred_check_branch
          %184 = sbr.rel (%p182) target = $region32
        $region31: #{tpu_custom_call.1} parent=27 // pred_region
          %185 = dma.done %s178, 128
        $region32: #{tpu_custom_call.1} parent=27 // pred_fallthru
          _
        %s186 = sand.u32 %s69, 1
        %s187 = scalar_lea.sflag [#allocation5], %s186
        %s188 = sand.u32 %s69, 1
        %s189 = smul.addr %s188, 2
        %s190 = scalar_lea.vmem [#allocation4], %s189
        // Predicated region
        $region33: #{tpu_custom_call.1} parent=27 // pred_check
          %p191 = pneg %p82
        $region34: #{tpu_custom_call.1} parent=27 // pred_check_branch
          %193 = sbr.rel (%p191) target = $region36
        $region35: #{tpu_custom_call.1} parent=27 // pred_region
          %194 = dma.done %s187, 32
        $region36: #{tpu_custom_call.1} parent=27 // pred_fallthru
          _
        %s195 = sand.u32 %s41, 1
        %s196 = scalar_lea.sflag [#allocation3], %s195
        %s197 = sand.u32 %s41, 1
        %s198 = smul.addr %s197, 8
        %s199 = scalar_lea.vmem [#allocation2], %s198
        %p200 = pneg %p54
        %p201 = pneg %p51
        %s202 = sand.u32 %s69, 1
        %s203 = scalar_lea.sflag [#allocation5], %s202
        %s204 = sand.u32 %s69, 1
        %s205 = smul.addr %s204, 2
        %s206 = scalar_lea.vmem [#allocation4], %s205
        %p207 = pneg %p82
        %p208 = pneg %p79
        %p209 = pneg %p110
        %p210 = pneg %p107
        %p211 = scmp.lt.s32.totalorder %s23, 1
        %s212 = scalar_select %p211, %s23, 1
        %p213 = scmp.lt.s32.totalorder %s24, 0
        %s214 = scalar_select %p213, %s24, 0
        %s215 = sadd.s32 %s214, %s212
        %s216 = scalar_lea.vmem %s2, %s215
        %p217 = scmp.lt.s32.totalorder %s23, 1
        %s218 = scalar_select %p217, %s23, 1
        %p219 = scmp.lt.s32.totalorder %s24, 0
        %s220 = scalar_select %p219, %s24, 0
        %s221 = sadd.s32 %s220, %s218
        %s222 = scalar_lea.vmem %s2, %s221
        %v223 = vld [vmem:[%s190] sm:$0x3]
        %s224 = scalar_lea.vmem %s181, 6 [#allocation2]
        %v225 = vld [vmem:[%s224] sm:$0x3]
        %vm226 = vcmp.eq.s32.totalorder %v223, 2
        %s227 = scalar_lea.vmem %s181, 4 [#allocation2]
        %v228 = vld [vmem:[%s227] sm:$0x3]
        %v229 = vsel %vm226, %v228, %v225
        %vm230 = vcmp.eq.s32.totalorder %v223, 1
        %s231 = scalar_lea.vmem %s181, 2 [#allocation2]
        %v232 = vld [vmem:[%s231] sm:$0x3]
        %v233 = vsel %vm230, %v232, %v229
        %vm234 = vcmp.eq.s32.totalorder %v223, 0
        %v235 = vld [vmem:[%s181] sm:$0x3]
        %v236 = vsel %vm234, %v235, %v233
        %v237 = vadd.f32 %v236, 1e-10
        %v238 = vlog2.pop %v237
        %v239 = vmul.f32 %v238, 0.6931472
        %v240 = vsub.f32 1.0, %v237
        %v241 = vmul.f32 %v240, %v240
        %v242 = vmul.f32 %v241, %v239
        %vm243 = vcmask 1041408
        %v244 = vsel %vm243, %v242, 0.0
        %245 = vadd.xlane.f32.xlu0 %v244
        %v246 = vpop.xlane.xlu0 %245
        %v247 = vrot.slane %v246, 4
        %v248 = vadd.f32 %v246, %v247
        %v249 = vrot.slane %v248, 2
        %v250 = vadd.f32 %v248, %v249
        %v251 = vrot.slane %v250, 1
        %v252 = vadd.f32 %v250, %v251
        %s253 = vtos %v252
        %s254 = ssub.f32 0.0, %s253
        %v255 = vstv %s254
        %vm256 = vcmask 0
        %257 = vst.msk [vmem:[%s222] sm:$0x1] %vm256, %v255
        %p258 = scmp.lt.s32.totalorder %s23, 1
        %s259 = scalar_select %p258, %s23, 1
        %p260 = scmp.lt.s32.totalorder %s24, 0
        %s261 = scalar_select %p260, %s24, 0
        %s262 = sadd.s32 %s261, %s259
        %s263 = scalar_lea.vmem %s2, %s262
        // Predicated region
        $region37: #{tpu_custom_call.1} parent=27 // pred_check
          %p264 = pneg %p107
        $region38: #{tpu_custom_call.1} parent=27 // pred_check_branch
          %266 = sbr.rel (%p264) target = $region40
        $region39: #{tpu_custom_call.1} parent=27 // pred_region
          _
        $region40: #{tpu_custom_call.1} parent=27 // pred_fallthru
          _
      $region28: #{tpu_custom_call.1} parent=5 // pred_fallthru
        _
      %p267 = scmp.le.s32.totalorder 2, %s14
      // Predicated region
      $region41: #{tpu_custom_call.1} parent=5 // pred_check
        %p268 = pneg %p267
      $region42: #{tpu_custom_call.1} parent=5 // pred_check_branch
        %270 = sbr.rel (%p268) target = $region44
      $region43: #{tpu_custom_call.1} parent=5 // pred_region
        %s271 = ssub.s32 %s14, 2
        // Predicated region
        $region45: #{tpu_custom_call.1} parent=43 // pred_check
          %p272 = pneg %p113
        $region46: #{tpu_custom_call.1} parent=43 // pred_check_branch
          %274 = sbr.rel (%p272) target = $region48
        $region47: #{tpu_custom_call.1} parent=43 // pred_region
          %p275 = scmp.lt.s32.totalorder %s25, 1
          %s276 = scalar_select %p275, %s25, 1
          %p277 = scmp.lt.s32.totalorder %s26, 0
          %s278 = scalar_select %p277, %s26, 0
          %s279 = sadd.s32 %s278, %s276
          %s280 = scalar_lea.vmem %s2, %s279
        $region48: #{tpu_custom_call.1} parent=43 // pred_fallthru
          _
      $region44: #{tpu_custom_call.1} parent=5 // pred_fallthru
        _
    $region6: #{tpu_custom_call.1} parent=1 // loop_footer
      %s18 = sadd.s32 1, %s14
    $region7: #{tpu_custom_call.1} parent=1 // loop_footer_branch
      %13 = sbr.rel target = $region3
    $region8: #{tpu_custom_call.1} parent=1 // loop_exit
      _
    %281 = vsyncpa [#allocation3], 1
    %s282 = scalar_lea.sflag [#allocation3], 1
    %283 = vsyncpa %s282, 1
    %284 = vsyncpa [#allocation5], 1
    %s285 = scalar_lea.sflag [#allocation5], 1
    %286 = vsyncpa %s285, 1

</llo_original>
